<compile_context>
chip_gen: v7x
topology: tpu7x:2x2x1
jax: 0.10.0
libtpu: 0.0.40
codegen_flags: <defaults>
</compile_context>

<pallas_src>
import jax
import jax.numpy as jnp
from jax.experimental import pallas as pl
from jax.experimental.pallas import tpu as pltpu


def _round_up(v, m):
    return (v + m - 1) // m * m


def _sublane_multiple(dtype):
    # Minimum second-to-last tile dim per dtype (sub-32-bit packs along sublanes).
    return {4: 8, 2: 16, 1: 32}.get(jnp.dtype(dtype).itemsize, 8)


def _feature_pad(d):
    # 256-aligned feature axis for the 2x256x256 MXUs (v6e/v7x); 128 for tiny D.
    return 128 if d <= 128 else _round_up(d, 256)


# ----------------------------------------------------------------------------
# Kernel 1: fused  out = x @ W + b + x   (tiled matmul + residual epilogue)
# ----------------------------------------------------------------------------
def _residual_linear_kernel(x_ref, w_ref, b_ref, xr_ref, o_ref, acc_ref):
    k = pl.program_id(2)

    @pl.when(k == 0)
    def _():
        # Fold the bias into the accumulator init (saves an epilogue add and a
        # per-tile broadcast later).
        acc_ref[...] = jnp.broadcast_to(
            b_ref[...].astype(jnp.float32), acc_ref.shape)

    # Inner loop: MXU only (f32 accumulation).
    acc_ref[...] += jnp.dot(x_ref[...], w_ref[...],
                            preferred_element_type=jnp.float32)

    # Epilogue on the last K step: residual add + cast, once per (i, j) tile.
    @pl.when(k == pl.num_programs(2) - 1)
    def _():
        o_ref[...] = (acc_ref[...]
                      + xr_ref[...].astype(jnp.float32)).astype(o_ref.dtype)


def residual_linear(x2, w, b, *, mxu_dtype=None,
                    tile_m=512, tile_n=512, tile_k=512):
    """x2: (M, D).  w, b may already be padded to (Dp, Dp)/(1, Dp) with
    Dp = _feature_pad(D); otherwise they are padded here.
    Returns x2 @ w + b + x2 in x2.dtype."""
    M, D = x2.shape
    Dp = _feature_pad(D)

    # Weights / bias: use pre-padded versions if the caller provides them.
    wp = w if w.shape == (Dp, Dp) else jnp.pad(w, ((0, Dp - D), (0, Dp - D)))
    bp = b if b.shape == (1, Dp) else jnp.pad(b, ((0, 0), (0, Dp - D)))

    # Tile selection: largest MXU-friendly tile dividing Dp (Dp is a multiple
    # of 256 whenever D > 128, so tn/tk are >= 256 there).
    tn = next(t for t in (tile_n, 512, 256, 128) if Dp % t == 0)
    tk = next(t for t in (tile_k, 512, 256, 128) if Dp % t == 0)

    lhs_dtype = mxu_dtype if mxu_dtype is not None else x2.dtype
    sub = max(_sublane_multiple(lhs_dtype), _sublane_multiple(x2.dtype))
    tm = min(tile_m, _round_up(M, sub))
    Mp = _round_up(M, tm)

    xp = x2
    if (Mp, Dp) != (M, D):
        xp = jnp.pad(x2, ((0, Mp - M), (0, Dp - D)))

    # Optional bf16 MXU inputs (halves x/W DMA bytes, native MXU format on
    # v6e/v7x).  Residual stream and accumulator stay full precision.
    x_lhs = xp.astype(mxu_dtype) if mxu_dtype is not None else xp
    w_mm = wp.astype(mxu_dtype) if mxu_dtype is not None else wp
    bp = bp.astype(jnp.float32)

    grid = (Mp // tm, Dp // tn, Dp // tk)
    in_item = jnp.dtype(x_lhs.dtype).itemsize
    res_item = jnp.dtype(x2.dtype).itemsize

    cost = pl.CostEstimate(
        flops=2 * Mp * Dp * Dp,
        transcendentals=0,
        bytes_accessed=int(
            (Dp // tn) * Mp * Dp * in_item      # x re-streamed per N tile
            + (Mp // tm) * Dp * Dp * in_item    # W re-streamed per M tile
            + 2 * Mp * Dp * res_item            # residual read + output write
            + Dp * 4),
    )

    out = pl.pallas_call(
        _residual_linear_kernel,
        out_shape=jax.ShapeDtypeStruct((Mp, Dp), x2.dtype),
        grid_spec=pltpu.PrefetchScalarGridSpec(
            num_scalar_prefetch=0,
            grid=grid,
            in_specs=[
                pl.BlockSpec((tm, tk), lambda i, j, k: (i, k)),   # x (matmul LHS)
                pl.BlockSpec((tk, tn), lambda i, j, k: (k, j)),   # W tile
                pl.BlockSpec((1, tn), lambda i, j, k: (0, j)),    # bias row
                pl.BlockSpec((tm, tn), lambda i, j, k: (i, j)),   # x (residual)
            ],
            out_specs=pl.BlockSpec((tm, tn), lambda i, j, k: (i, j)),
            scratch_shapes=[pltpu.VMEM((tm, tn), jnp.float32)],
        ),
        compiler_params=pltpu.CompilerParams(
            # M/N parallel -> megacore sharding (matters on v7x: 2 TCs);
            # K is the reduction axis -> arbitrary, innermost.
            dimension_semantics=("parallel", "parallel", "arbitrary"),
            # 512^3 f32 tiles double-buffered are ~10 MiB; set the limit
            # explicitly (v5e scoped default is only 16 MiB).
            vmem_limit_bytes=32 * 1024 * 1024,
        ),
        cost_estimate=cost,
    )(x_lhs, w_mm, bp, xp)

    if (Mp, Dp) != (M, D):
        out = out[:M, :D]
    return out


# ----------------------------------------------------------------------------
# Kernel 2: generic residual add  out = fx + x   (lane-dense slab, mem-bound)
# ----------------------------------------------------------------------------
def _residual_add_kernel(fx_ref, x_ref, o_ref):
    o_ref[...] = fx_ref[...] + x_ref[...]


def residual_add(fx, x, *, lane=512, target_block_bytes=2 << 20):
    """Elementwise residual add.  Flattens to a lane-dense (rows, lane) slab so
    stores are unmasked and VMEM use is byte-budgeted regardless of D."""
    assert fx.shape == x.shape
    fx = fx.astype(x.dtype)
    itemsize = jnp.dtype(x.dtype).itemsize
    sub = _sublane_multiple(x.dtype)

    n = x.size
    rows = pl.cdiv(n, lane)
    # ~target_block_bytes per buffer (x3 arrays x2 buffers ≈ 12 MiB at 2 MiB).
    tile_rows = max(sub, (target_block_bytes // (lane * itemsize)) // sub * sub)
    tile_rows = min(tile_rows, _round_up(rows, sub))
    Rp = _round_up(rows, tile_rows)

    fxf = fx.reshape(-1)
    xf = x.reshape(-1)
    npad = Rp * lane - n
    if npad:
        fxf = jnp.pad(fxf, (0, npad))
        xf = jnp.pad(xf, (0, npad))
    fx2 = fxf.reshape(Rp, lane)
    x2 = xf.reshape(Rp, lane)

    spec = pl.BlockSpec((tile_rows, lane), lambda i: (i, 0))
    out = pl.pallas_call(
        _residual_add_kernel,
        out_shape=jax.ShapeDtypeStruct((Rp, lane), x.dtype),
        grid_spec=pltpu.PrefetchScalarGridSpec(
            num_scalar_prefetch=0,
            grid=(Rp // tile_rows,),
            in_specs=[spec, spec],
            out_specs=spec,
        ),
        compiler_params=pltpu.CompilerParams(
            dimension_semantics=("parallel",),
            vmem_limit_bytes=32 * 1024 * 1024),
    )(fx2, x2)
    return out.reshape(-1)[:n].reshape(x.shape)


# ----------------------------------------------------------------------------
# Residual wrapper (mirrors the PyTorch module's semantics)
# ----------------------------------------------------------------------------
class Residual:
    """out = fn(x, **kwargs) + x.

    If fn exposes `pallas_fused_residual`, matmul + bias + residual run as one
    Pallas kernel.  Otherwise fn runs in plain JAX and, by default, the
    residual add is left to XLA to fuse into fn's epilogue (cheapest: avoids
    an extra HBM round-trip of fx).  Set use_pallas_add=True to instead run
    the lane-dense Pallas add kernel.
    """

    def __init__(self, fn, use_pallas_add=False):
        self.fn = fn
        self.use_pallas_add = use_pallas_add

    def __call__(self, x, **kwargs):
        B, N, D = x.shape
        if hasattr(self.fn, "pallas_fused_residual"):
            out2 = self.fn.pallas_fused_residual(x.reshape(B * N, D), **kwargs)
            return out2.reshape(B, N, D)
        fx = self.fn(x, **kwargs)
        if self.use_pallas_add:
            return residual_add(fx, x)
        return fx + x


class Linear:
    """Token-wise linear fn with a fused-residual Pallas path."""

    def __init__(self, w, b, mxu_dtype=None):
        D = w.shape[0]
        Dp = _feature_pad(D)
        self.w = w           # (D, D)  — used by the plain-JAX __call__
        self.b = b           # (1, D)
        # Pre-pad once (removes a D^2 HBM copy from every forward call).
        self.wp = jnp.pad(w, ((0, Dp - D), (0, Dp - D))) if Dp != D else w
        self.bp = jnp.pad(b, ((0, 0), (0, Dp - D))) if Dp != D else b
        self.mxu_dtype = mxu_dtype

    def __call__(self, x):
        return jnp.einsum("bnd,de->bne", x, self.w) + self.b[None]

    def pallas_fused_residual(self, x_2d):
        return residual_linear(x_2d, self.wp, self.bp, mxu_dtype=self.mxu_dtype)


# ----------------------------------------------------------------------------
if __name__ == "__main__":
    key = jax.random.PRNGKey(0)
    kx, kw, kb = jax.random.split(key, 3)

    B, N, D = 2, 8, 32          # batch=2, seq=8, hidden=32
    x = jax.random.normal(kx, (B, N, D), dtype=jnp.float32)
    w = jax.random.normal(kw, (D, D), dtype=jnp.float32) * 0.05
    b = jax.random.normal(kb, (1, D), dtype=jnp.float32) * 0.1

    fn = Linear(w, b)
    ref = fn(x) + x

    # Path 1: fused matmul + bias + residual in one Pallas kernel (f32 MXU in).
    out_fused = jax.block_until_ready(Residual(fn)(x))
    assert out_fused.shape == x.shape
    assert jnp.allclose(out_fused, ref, atol=1e-4, rtol=1e-4), "fused path mismatch"

    # Path 1b: same kernel with bf16 MXU inputs (f32 accumulate, f32 residual).
    out_bf16 = jax.block_until_ready(Residual(Linear(w, b, mxu_dtype=jnp.bfloat16))(x))
    assert jnp.allclose(out_bf16, ref, atol=3e-2, rtol=3e-2), "bf16 fused path mismatch"

    # Path 2: arbitrary fn (plain JAX) + Pallas lane-dense residual add.
    # TODO(synk): arbitrary user fns stay in plain JAX; only Residual's own op
    # (the add) / the Linear special-case is a Pallas kernel.
    gelu_fn = lambda t: jax.nn.gelu(t)
    ref2 = jax.nn.gelu(x) + x
    out_generic = jax.block_until_ready(Residual(gelu_fn, use_pallas_add=True)(x))
    assert jnp.allclose(out_generic, ref2, atol=1e-4, rtol=1e-4), "pallas add mismatch"

    # Path 3: default generic path — XLA fuses the add into fn's epilogue.
    out_default = jax.block_until_ready(Residual(gelu_fn)(x))
    assert jnp.allclose(out_default, ref2, atol=1e-4, rtol=1e-4), "default path mismatch"

    print("KERNEL_OK")
</pallas_src>

<mosaic_0001>
module attributes {stable_mosaic.version = 11 : i64} {
  func.func @_residual_linear_kernel(%arg0: i32, %arg1: i32, %arg2: i32, %arg3: memref<16x128xf32, #tpu.memory_space<vmem>>, %arg4: memref<128x128xf32, #tpu.memory_space<vmem>>, %arg5: memref<1x128xf32, #tpu.memory_space<vmem>>, %arg6: memref<16x128xf32, #tpu.memory_space<vmem>>, %arg7: memref<16x128xf32, #tpu.memory_space<vmem>>, %arg8: memref<16x128xf32, #tpu.memory_space<vmem>>) attributes {dimension_semantics = [#tpu.dimension_semantics<parallel>, #tpu.dimension_semantics<parallel>, #tpu.dimension_semantics<arbitrary>], iteration_bounds = array<i64: 1, 1, 1>, scalar_prefetch = 0 : i64, scratch_operands = 1 : i64, tpu.core_type = #tpu.core_type<tc>, window_params = [{transform_indices = @transform_0, window_bounds = array<i64: 16, 128>}, {transform_indices = @transform_1, window_bounds = array<i64: 128, 128>}, {transform_indices = @transform_2, window_bounds = array<i64: 1, 128>}, {transform_indices = @transform_3, window_bounds = array<i64: 16, 128>}, {transform_indices = @transform_4, window_bounds = array<i64: 16, 128>}]} {
    %c0_i32 = arith.constant 0 : i32
    %0 = arith.cmpi eq, %arg2, %c0_i32 : i32
    %1 = arith.extui %0 : i1 to i32
    %c0_i32_0 = arith.constant 0 : i32
    %2 = arith.cmpi ne, %1, %c0_i32_0 : i32
    scf.if %2 {
      %c0_10 = arith.constant 0 : index
      %c0_11 = arith.constant 0 : index
      %12 = vector.load %arg5[%c0_10, %c0_11] : memref<1x128xf32, #tpu.memory_space<vmem>>, vector<1x128xf32>
      %13 = vector.shape_cast %12 : vector<1x128xf32> to vector<1x128xf32>
      %14 = vector.broadcast %13 : vector<1x128xf32> to vector<16x128xf32>
      %c0_12 = arith.constant 0 : index
      %c0_13 = arith.constant 0 : index
      %15 = vector.load %arg8[%c0_12, %c0_13] : memref<16x128xf32, #tpu.memory_space<vmem>>, vector<16x128xf32>
      tpu.vector_store %arg8[%c0_12, %c0_13], %14 {strides = array<i32>} : memref<16x128xf32, #tpu.memory_space<vmem>>, vector<16x128xf32>,
    } else {
    }
    %c0 = arith.constant 0 : index
    %c0_1 = arith.constant 0 : index
    %3 = vector.load %arg8[%c0, %c0_1] : memref<16x128xf32, #tpu.memory_space<vmem>>, vector<16x128xf32>
    %c0_2 = arith.constant 0 : index
    %c0_3 = arith.constant 0 : index
    %4 = vector.load %arg3[%c0_2, %c0_3] : memref<16x128xf32, #tpu.memory_space<vmem>>, vector<16x128xf32>
    %c0_4 = arith.constant 0 : index
    %c0_5 = arith.constant 0 : index
    %5 = vector.load %arg4[%c0_4, %c0_5] : memref<128x128xf32, #tpu.memory_space<vmem>>, vector<128x128xf32>
    %cst = arith.constant dense<0.000000e+00> : vector<16x128xf32>
    %6 = tpu.matmul %4, %5, %cst {dimension_numbers = #tpu.dot_dimension_numbers<[1], [0], [0], [1], [0, 0, 1, 1], [], []>} : vector<16x128xf32>, vector<128x128xf32>, vector<16x128xf32> -> vector<16x128xf32>
    %7 = arith.addf %3, %6 : vector<16x128xf32>
    %c0_6 = arith.constant 0 : index
    %c0_7 = arith.constant 0 : index
    %8 = vector.load %arg8[%c0_6, %c0_7] : memref<16x128xf32, #tpu.memory_space<vmem>>, vector<16x128xf32>
    tpu.vector_store %arg8[%c0_6, %c0_7], %7 {strides = array<i32>} : memref<16x128xf32, #tpu.memory_space<vmem>>, vector<16x128xf32>,
    %c0_i32_8 = arith.constant 0 : i32
    %9 = arith.cmpi eq, %arg2, %c0_i32_8 : i32
    %10 = arith.extui %9 : i1 to i32
    %c0_i32_9 = arith.constant 0 : i32
    %11 = arith.cmpi ne, %10, %c0_i32_9 : i32
    scf.if %11 {
      %c0_10 = arith.constant 0 : index
      %c0_11 = arith.constant 0 : index
      %12 = vector.load %arg8[%c0_10, %c0_11] : memref<16x128xf32, #tpu.memory_space<vmem>>, vector<16x128xf32>
      %c0_12 = arith.constant 0 : index
      %c0_13 = arith.constant 0 : index
      %13 = vector.load %arg6[%c0_12, %c0_13] : memref<16x128xf32, #tpu.memory_space<vmem>>, vector<16x128xf32>
      %14 = arith.addf %12, %13 : vector<16x128xf32>
      %c0_14 = arith.constant 0 : index
      %c0_15 = arith.constant 0 : index
      %15 = vector.load %arg7[%c0_14, %c0_15] : memref<16x128xf32, #tpu.memory_space<vmem>>, vector<16x128xf32>
      tpu.vector_store %arg7[%c0_14, %c0_15], %14 {strides = array<i32>} : memref<16x128xf32, #tpu.memory_space<vmem>>, vector<16x128xf32>,
    } else {
    }
    return
  }
  func.func @transform_0(%arg0: i32, %arg1: i32, %arg2: i32) -> (i32, i32) {
    %c0_i32 = arith.constant 0 : i32
    return %arg0, %arg2 : i32, i32
  }
  func.func @transform_1(%arg0: i32, %arg1: i32, %arg2: i32) -> (i32, i32) {
    %c0_i32 = arith.constant 0 : i32
    return %arg2, %arg1 : i32, i32
  }
  func.func @transform_2(%arg0: i32, %arg1: i32, %arg2: i32) -> (i32, i32) {
    %c0_i32 = arith.constant 0 : i32
    %c0_i32_0 = arith.constant 0 : i32
    return %c0_i32, %arg1 : i32, i32
  }
  func.func @transform_3(%arg0: i32, %arg1: i32, %arg2: i32) -> (i32, i32) {
    %c0_i32 = arith.constant 0 : i32
    return %arg0, %arg1 : i32, i32
  }
  func.func @transform_4(%arg0: i32, %arg1: i32, %arg2: i32) -> (i32, i32) {
    %c0_i32 = arith.constant 0 : i32
    return %arg0, %arg1 : i32, i32
  }
}

</mosaic_0001>

<llo_original>
// kernel: tpu_custom_call.1
$region0: #{tpu_custom_call.1}
  #allocation0 [shape = 'u32[]', space=smem, size = 0x4, offset = 0x4, fixed_abs, tag = 'smem constant byte address 0x4 - core index']
  #allocation1 [shape = 'u32[144,128]{1,0:T(1,128)}', space=vmem, size = 0x12000, scoped, tag = 'internal scratch']
  #allocation2 [shape = 'f32[16,128]{1,0:T(8,128)}', space=vmem, size = 0x2000, scoped, tag = 'scratch operand']
  %s0 = inlined_call_operand.hbm [shape: f32[16,128], index: 0, kind: input, shape index: {}]
  %s1 = inlined_call_operand.hbm [shape: f32[128,128], index: 1, kind: input, shape index: {}]
  %s2 = inlined_call_operand.vmem [shape: f32[1,128], index: 2, kind: input, shape index: {}]
  %s3 = inlined_call_operand.hbm [shape: f32[16,128], index: 3, kind: input, shape index: {}]
  %s4 = inlined_call_operand.hbm [shape: f32[16,128], index: 4, kind: output, shape index: {}]
  %s5 = sld [smem:[#allocation0]]
  $region46: #{tpu_custom_call.1} parent=0
    _
  %s7 = ssub.s32 1, %s5
  %s8 = scalar_select 0, %s7, %s5
  $region1: #{tpu_custom_call.1} parent=0
    #allocation3 [shape = 'u8[8192]{0}', space=vmem, size = 0x2000, scoped, tag = 'input window, operand 0, single buffered']
    #allocation4 [shape = 's32[1]{0}', space=sflag, size = 0x4, scoped, tag = 'scoped memory for tpu_custom_call.1']
    #allocation5 [shape = 's32[1]{0}', space=sflag, size = 0x4, scoped, tag = 'scoped memory for tpu_custom_call.1']
    #allocation6 [shape = 'u8[65536]{0}', space=vmem, size = 0x10000, scoped, tag = 'input window, operand 1, single buffered']
    #allocation7 [shape = 's32[1]{0}', space=sflag, size = 0x4, scoped, tag = 'scoped memory for tpu_custom_call.1']
    #allocation8 [shape = 'u8[8192]{0}', space=vmem, size = 0x2000, scoped, tag = 'input window, operand 3, single buffered']
    #allocation9 [shape = 'u8[8192]{0}', space=vmem, size = 0x2000, scoped, tag = 'output window, operand 0, single buffered']
    %9 = vsyncpa [#allocation4], 0
    %10 = vsyncpa [#allocation7], 0
    %11 = vsyncpa [#allocation5], 0
    // Predicated region
    $region2: #{tpu_custom_call.1} parent=1 // pred_check
      _
    $region3: #{tpu_custom_call.1} parent=1 // pred_check_branch
      %13 = sbr.rel (0) target = $region5
    $region4: #{tpu_custom_call.1} parent=1 // pred_region
      %s15 = ssub.s32 256, 256
      %16 = vsyncadd [#allocation4], %s15
      %s17 = sshll.u32 [#allocation3], 4
      %s18 = int_to_ptr.vmem [resolvable:$true] %s17
      %23 = dma.hbm_to_vmem [thread:$0]  %s0, 256, %s18, [#allocation4], 128, 128, 8
    $region5: #{tpu_custom_call.1} parent=1 // pred_fallthru
      _
    // Predicated region
    $region6: #{tpu_custom_call.1} parent=1 // pred_check
      _
    $region7: #{tpu_custom_call.1} parent=1 // pred_check_branch
      %25 = sbr.rel (0) target = $region9
    $region8: #{tpu_custom_call.1} parent=1 // pred_region
      %s27 = ssub.s32 2048, 2048
      %28 = vsyncadd [#allocation7], %s27
      %s29 = sshll.u32 [#allocation6], 4
      %s30 = int_to_ptr.vmem [resolvable:$true] %s29
      %35 = dma.hbm_to_vmem [thread:$0]  %s1, 2048, %s30, [#allocation7], 128, 128, 8
    $region9: #{tpu_custom_call.1} parent=1 // pred_fallthru
      _
    // Predicated region
    $region10: #{tpu_custom_call.1} parent=1 // pred_check
      _
    $region11: #{tpu_custom_call.1} parent=1 // pred_check_branch
      %37 = sbr.rel (0) target = $region13
    $region12: #{tpu_custom_call.1} parent=1 // pred_region
      _
    $region13: #{tpu_custom_call.1} parent=1 // pred_fallthru
      _
    // Predicated region
    $region14: #{tpu_custom_call.1} parent=1 // pred_check
      _
    $region15: #{tpu_custom_call.1} parent=1 // pred_check_branch
      %39 = sbr.rel (0) target = $region17
    $region16: #{tpu_custom_call.1} parent=1 // pred_region
      %s41 = ssub.s32 256, 256
      %42 = vsyncadd [#allocation7], %s41
      %s43 = sshll.u32 [#allocation8], 4
      %s44 = int_to_ptr.vmem [resolvable:$true] %s43
      %49 = dma.hbm_to_vmem [thread:$0]  %s3, 256, %s44, [#allocation7], 128, 128, 8
    $region17: #{tpu_custom_call.1} parent=1 // pred_fallthru
      _
    // Predicated region
    $region18: #{tpu_custom_call.1} parent=1 // pred_check
      _
    $region19: #{tpu_custom_call.1} parent=1 // pred_check_branch
      %51 = sbr.rel (0) target = $region21
    $region20: #{tpu_custom_call.1} parent=1 // pred_region
      %52 = dma.done [#allocation4], 256
    $region21: #{tpu_custom_call.1} parent=1 // pred_fallthru
      _
    // Predicated region
    $region22: #{tpu_custom_call.1} parent=1 // pred_check
      _
    $region23: #{tpu_custom_call.1} parent=1 // pred_check_branch
      %54 = sbr.rel (0) target = $region25
    $region24: #{tpu_custom_call.1} parent=1 // pred_region
      %55 = dma.done [#allocation7], 2048
    $region25: #{tpu_custom_call.1} parent=1 // pred_fallthru
      _
    // Predicated region
    $region26: #{tpu_custom_call.1} parent=1 // pred_check
      _
    $region27: #{tpu_custom_call.1} parent=1 // pred_check_branch
      %57 = sbr.rel (0) target = $region29
    $region28: #{tpu_custom_call.1} parent=1 // pred_region
      %58 = dma.done [#allocation7], 256
    $region29: #{tpu_custom_call.1} parent=1 // pred_fallthru
      _
    %p59 = scmp.eq.s32.totalorder 0, 0
    // Predicated region
    $region30: #{tpu_custom_call.1} parent=1 // pred_check
      %p60 = pneg %p59
    $region31: #{tpu_custom_call.1} parent=1 // pred_check_branch
      %62 = sbr.rel (%p60) target = $region33
    $region32: #{tpu_custom_call.1} parent=1 // pred_region
      %v63 = vld [vmem:[%s2] sm:$0x1]
      %v65 = vlaneseq
      %v66 = vshrl.u32 %v65, 7
      %v67 = vsub.s32 0, %v66
      %v68 = vrot.slane %v63, %v67
      %70 = vst [vmem:[#allocation2] sm:$0xff] %v68
      %71 = vst [vmem:[#allocation2 + $0x8] sm:$0xff] %v68
    $region33: #{tpu_custom_call.1} parent=1 // pred_fallthru
      _
    %v72 = vld [vmem:[#allocation2] sm:$0xff]
    %v73 = vld [vmem:[#allocation2 + $0x8] sm:$0xff]
    %v74 = vld [vmem:[#allocation3] sm:$0xff]
    %v75 = vld [vmem:[#allocation3 + $0x8] sm:$0xff]
    %v76 = vld [vmem:[#allocation6] sm:$0xff]
    %v77 = vld [vmem:[#allocation6 + $0x8] sm:$0xff]
    %v78 = vld [vmem:[#allocation6 + $0x10] sm:$0xff]
    %v79 = vld [vmem:[#allocation6 + $0x18] sm:$0xff]
    %v80 = vld [vmem:[#allocation6 + $0x20] sm:$0xff]
    %v81 = vld [vmem:[#allocation6 + $0x28] sm:$0xff]
    %v82 = vld [vmem:[#allocation6 + $0x30] sm:$0xff]
    %v83 = vld [vmem:[#allocation6 + $0x38] sm:$0xff]
    %v84 = vld [vmem:[#allocation6 + $0x40] sm:$0xff]
    %v85 = vld [vmem:[#allocation6 + $0x48] sm:$0xff]
    %v86 = vld [vmem:[#allocation6 + $0x50] sm:$0xff]
    %v87 = vld [vmem:[#allocation6 + $0x58] sm:$0xff]
    %v88 = vld [vmem:[#allocation6 + $0x60] sm:$0xff]
    %v89 = vld [vmem:[#allocation6 + $0x68] sm:$0xff]
    %v90 = vld [vmem:[#allocation6 + $0x70] sm:$0xff]
    %v91 = vld [vmem:[#allocation6 + $0x78] sm:$0xff]
    %92 = vmatprep.subr.mxu0 0.0
    %93 = vmatpush1.msra.mxu0 %v76
    %94 = vmatprep.subr.mxu0 0.0
    %95 = vmatpush1.msra.mxu0 %v77
    %96 = vmatprep.subr.mxu0 0.0
    %97 = vmatpush1.msra.mxu0 %v78
    %98 = vmatprep.subr.mxu0 0.0
    %99 = vmatpush1.msra.mxu0 %v79
    %100 = vmatprep.subr.mxu0 0.0
    %101 = vmatpush1.msra.mxu0 %v80
    %102 = vmatprep.subr.mxu0 0.0
    %103 = vmatpush1.msra.mxu0 %v81
    %104 = vmatprep.subr.mxu0 0.0
    %105 = vmatpush1.msra.mxu0 %v82
    %106 = vmatprep.subr.mxu0 0.0
    %107 = vmatpush1.msra.mxu0 %v83
    %108 = vmatprep.subr.mxu0 0.0
    %109 = vmatpush1.msra.mxu0 %v84
    %110 = vmatprep.subr.mxu0 0.0
    %111 = vmatpush1.msra.mxu0 %v85
    %112 = vmatprep.subr.mxu0 0.0
    %113 = vmatpush1.msra.mxu0 %v86
    %114 = vmatprep.subr.mxu0 0.0
    %115 = vmatpush1.msra.mxu0 %v87
    %116 = vmatprep.subr.mxu0 0.0
    %117 = vmatpush1.msra.mxu0 %v88
    %118 = vmatprep.subr.mxu0 0.0
    %119 = vmatpush1.msra.mxu0 %v89
    %120 = vmatprep.subr.mxu0 0.0
    %121 = vmatpush1.msra.mxu0 %v90
    %122 = vmatprep.subr.mxu0 0.0
    %123 = vmatpush1.msra.mxu0 %v91
    %124 = vmatprep.subr.mxu0 0.0
    %125 = vmatpush1.msra.mxu0 0.0
    %126 = vmatprep.subr.mxu0 0.0
    %127 = vmatpush1.msra.mxu0 0.0
    %128 = vmatprep.subr.mxu0 0.0
    %129 = vmatpush1.msra.mxu0 0.0
    %130 = vmatprep.subr.mxu0 0.0
    %131 = vmatpush1.msra.mxu0 0.0
    %132 = vmatprep.subr.mxu0 0.0
    %133 = vmatpush1.msra.mxu0 0.0
    %134 = vmatprep.subr.mxu0 0.0
    %135 = vmatpush1.msra.mxu0 0.0
    %136 = vmatprep.subr.mxu0 0.0
    %137 = vmatpush1.msra.mxu0 0.0
    %138 = vmatprep.subr.mxu0 0.0
    %139 = vmatpush1.msra.mxu0 0.0
    %140 = vmatprep.subr.mxu0 0.0
    %141 = vmatpush1.msra.mxu0 0.0
    %142 = vmatprep.subr.mxu0 0.0
    %143 = vmatpush1.msra.mxu0 0.0
    %144 = vmatprep.subr.mxu0 0.0
    %145 = vmatpush1.msra.mxu0 0.0
    %146 = vmatprep.subr.mxu0 0.0
    %147 = vmatpush1.msra.mxu0 0.0
    %148 = vmatprep.subr.mxu0 0.0
    %149 = vmatpush1.msra.mxu0 0.0
    %150 = vmatprep.subr.mxu0 0.0
    %151 = vmatpush1.msra.mxu0 0.0
    %152 = vmatprep.subr.mxu0 0.0
    %153 = vmatpush1.msra.mxu0 0.0
    %154 = vmatprep.subr.mxu0 0.0
    %155 = vmatpush1.msra.mxu0 0.0
    %156 = vmatprep.mubr.f32.mxu0 0.0
    %157 = vmatmul.mubr.f32.gmra.mrb[0].mxu0 %v74
    %v158 = vpop.f32.mrb[0].mxu0
    %v159 = vadd.f32 0.0, %v158
    %v160 = vpop.f32.mrb[0].mxu0
    %161 = vmatprep.mubr.f32.mxu0 0.0
    %162 = vmatmul.mubr.f32.gmra.mrb[0].mxu0 %v75
    %v163 = vpop.f32.mrb[0].mxu0
    %v164 = vadd.f32 0.0, %v163
    %v165 = vpop.f32.mrb[0].mxu0
    %166 = vdwg.mxu0
    %v167 = vadd.f32 %v72, %v159
    %v168 = vadd.f32 %v73, %v164
    %169 = vst [vmem:[#allocation2] sm:$0xff] %v167
    %170 = vst [vmem:[#allocation2 + $0x8] sm:$0xff] %v168
    // Predicated region
    $region34: #{tpu_custom_call.1} parent=1 // pred_check
      %p171 = pneg %p59
    $region35: #{tpu_custom_call.1} parent=1 // pred_check_branch
      %173 = sbr.rel (%p171) target = $region37
    $region36: #{tpu_custom_call.1} parent=1 // pred_region
      %v174 = vld [vmem:[#allocation2] sm:$0xff]
      %v175 = vld [vmem:[#allocation2 + $0x8] sm:$0xff]
      %v176 = vld [vmem:[#allocation8] sm:$0xff]
      %v177 = vld [vmem:[#allocation8 + $0x8] sm:$0xff]
      %v178 = vadd.f32 %v174, %v176
      %v179 = vadd.f32 %v175, %v177
      %180 = vst [vmem:[#allocation9] sm:$0xff] %v178
      %181 = vst [vmem:[#allocation9 + $0x8] sm:$0xff] %v179
    $region37: #{tpu_custom_call.1} parent=1 // pred_fallthru
      _
    // Predicated region
    $region38: #{tpu_custom_call.1} parent=1 // pred_check
      _
    $region39: #{tpu_custom_call.1} parent=1 // pred_check_branch
      %183 = sbr.rel (0) target = $region41
    $region40: #{tpu_custom_call.1} parent=1 // pred_region
      %s185 = ssub.s32 256, 256
      %186 = vsyncadd [#allocation5], %s185
      %s187 = sshll.u32 [#allocation9], 4
      %s188 = int_to_ptr.vmem [resolvable:$true] %s187
      %193 = dma.vmem_to_hbm [thread:$0]  %s188, 256, %s4, [#allocation5], 128, 128, 8
    $region41: #{tpu_custom_call.1} parent=1 // pred_fallthru
      _
    // Predicated region
    $region42: #{tpu_custom_call.1} parent=1 // pred_check
      _
    $region43: #{tpu_custom_call.1} parent=1 // pred_check_branch
      %195 = sbr.rel (0) target = $region45
    $region44: #{tpu_custom_call.1} parent=1 // pred_region
      %196 = dma.done [#allocation5], 256
    $region45: #{tpu_custom_call.1} parent=1 // pred_fallthru
      _
    %197 = vsyncpa [#allocation4], 1
    %198 = vsyncpa [#allocation7], 1
    %199 = vsyncpa [#allocation5], 1

</llo_original>
